<compile_context>
chip_gen: v5e
topology: v5e:2x2
jax: 0.10.0
libtpu: 0.0.40
codegen_flags: <defaults>
</compile_context>

<pallas_src>
import functools

import jax
import jax.numpy as jnp
from jax.experimental import pallas as pl
from jax.experimental.pallas import tpu as pltpu

# Large-but-finite mask value so masked rows/tiles never produce (-inf) - (-inf) = NaN
# inside the online softmax.
_MASK_VALUE = -0.7 * float(jnp.finfo(jnp.float32).max)

# Scoped-VMEM budget: safe on v7x (64 MiB physical) and leaves headroom on v5e/v6e
# (128 MiB).  Re-derive / raise for production shapes on v5e/v6e.
_VMEM_LIMIT_BYTES = 40 * 1024 * 1024


def _pick_block(dim, cap, align=8):
    """Largest legal block <= cap: either the full dim or a divisor that keeps the
    (8,128) BlockSpec constraint satisfiable."""
    if dim <= cap:
        return dim                       # full dimension is always a legal block
    for d in range(cap, 0, -1):
        if dim % d == 0 and d % align == 0:
            return d
    return dim                           # fall back to the full dimension


# ----------------------------------------------------------------------------- #
# Tiled dense layer:  y = (x @ w + b) * scale
# ----------------------------------------------------------------------------- #
def _dense_kernel(x_ref, w_ref, b_ref, o_ref, acc_ref, *, scale):
    k_step = pl.program_id(2)

    @pl.when(k_step == 0)
    def _init():
        acc_ref[...] = jnp.zeros_like(acc_ref)

    acc_ref[...] += jnp.dot(x_ref[...], w_ref[...],
                            preferred_element_type=jnp.float32)

    @pl.when(k_step == pl.num_programs(2) - 1)
    def _finalize():
        out = acc_ref[...] + b_ref[...].astype(jnp.float32)
        if scale != 1.0:
            out = out * jnp.float32(scale)
        o_ref[...] = out.astype(o_ref.dtype)


def _dense(x, w, b, *, scale=1.0, out_dtype=None,
           block_m=512, block_n=1024, block_k=512):
    """x: (M, K), w: (K, N), b: (1, N)  ->  (M, N).

    blk_n defaults toward full N for projection matmuls (x streamed exactly once);
    cap it for very wide layers.  Matmul operands keep their input dtype (pass bf16
    to feed the MXU bf16); accumulation / bias / scale are f32.
    """
    M, K = x.shape
    N = w.shape[1]
    blk_m = _pick_block(M, block_m, align=8)
    blk_n = _pick_block(N, block_n, align=128)
    blk_k = _pick_block(K, block_k, align=128)
    grid = (M // blk_m, N // blk_n, K // blk_k)
    out_dtype = out_dtype or x.dtype

    kernel = functools.partial(_dense_kernel, scale=float(scale))
    return pl.pallas_call(
        kernel,
        out_shape=jax.ShapeDtypeStruct((M, N), out_dtype),
        grid_spec=pltpu.PrefetchScalarGridSpec(
            num_scalar_prefetch=0,
            grid=grid,
            in_specs=[
                pl.BlockSpec((blk_m, blk_k), lambda m, n, k: (m, k)),
                pl.BlockSpec((blk_k, blk_n), lambda m, n, k: (k, n)),
                pl.BlockSpec((1, blk_n), lambda m, n, k: (0, n)),
            ],
            out_specs=pl.BlockSpec((blk_m, blk_n), lambda m, n, k: (m, n)),
            scratch_shapes=[pltpu.VMEM((blk_m, blk_n), jnp.float32)],
        ),
        compiler_params=pltpu.CompilerParams(
            dimension_semantics=("parallel", "parallel", "arbitrary"),
            vmem_limit_bytes=_VMEM_LIMIT_BYTES,
        ),
    )(x, w, b)


# ----------------------------------------------------------------------------- #
# Flash attention
# ----------------------------------------------------------------------------- #
def _flash_kernel(q_ref, k_ref, v_ref, o_ref, m_sc, l_sc, acc_sc,
                  *, causal, blk_q, blk_k):
    """Blocks are (Hb, blk_q|blk_k, hs); Hb = 1 (head-fused path) or n_head (fallback).
    1/sqrt(hs) is already folded into the query projection."""
    qt = pl.program_id(1)
    kt = pl.program_id(2)

    @pl.when(kt == 0)
    def _init():
        m_sc[...] = jnp.full_like(m_sc, -jnp.inf)
        l_sc[...] = jnp.zeros_like(l_sc)
        acc_sc[...] = jnp.zeros_like(acc_sc)

    def _accumulate():
        q = q_ref[...]                         # (Hb, blk_q, hs)
        k = k_ref[...]                         # (Hb, blk_k, hs)
        v = v_ref[...]                         # (Hb, blk_k, hs)

        # Contract on the head dim directly (no materialized k.T).
        s = jnp.einsum("hqd,hkd->hqk", q, k,
                       preferred_element_type=jnp.float32)      # (Hb, blk_q, blk_k)
        if causal:
            row = qt * blk_q + jax.lax.broadcasted_iota(jnp.int32, s.shape, 1)
            col = kt * blk_k + jax.lax.broadcasted_iota(jnp.int32, s.shape, 2)
            s = jnp.where(col <= row, s, _MASK_VALUE)

        m_prev = m_sc[...]
        m_new = jnp.maximum(m_prev, jnp.max(s, axis=-1, keepdims=True))
        alpha = jnp.exp(m_prev - m_new)                          # f32 on all gens
        p = jnp.exp(s - m_new)                                   # f32
        l_sc[...] = alpha * l_sc[...] + jnp.sum(p, axis=-1, keepdims=True)
        acc_sc[...] = alpha * acc_sc[...] + jnp.einsum(
            "hqk,hkd->hqd", p.astype(v.dtype), v,
            preferred_element_type=jnp.float32)
        m_sc[...] = m_new

    if causal:
        # Skip key tiles entirely in the future of this query tile (compute skip;
        # the DMA skip is handled by the clamped index_map in the wrapper).
        @pl.when(kt * blk_k <= qt * blk_q + (blk_q - 1))
        def _():
            _accumulate()
    else:
        _accumulate()

    @pl.when(kt == pl.num_programs(2) - 1)
    def _finalize():
        l = l_sc[...]
        inv_l = pl.reciprocal(l, approx=True)     # EUP slot
        inv_l = inv_l * (2.0 - l * inv_l)         # one Newton step -> f32 accuracy
        o_ref[...] = (acc_sc[...] * inv_l).astype(o_ref.dtype)


def _flash_attention(qp, kp, vp, *, n_head, causal, block_q=256, block_k=128,
                     out_dtype=None):
    """qp: (B, Tq, C), kp/vp: (B, Tk, C)  ->  (B, Tq, C)."""
    B, Tq, C = qp.shape
    Tk = kp.shape[1]
    hs = C // n_head
    out_dtype = out_dtype or qp.dtype
    blk_q = _pick_block(Tq, block_q, align=8)
    blk_k = _pick_block(Tk, block_k, align=8)
    kt_last = lambda qt: (qt * blk_q + blk_q - 1) // blk_k

    if causal:
        # Clamp so causally-skipped steps alias the last needed (already-resident)
        # K/V block -> no new DMA is issued for discarded tiles.
        def kv_block(qt, kt):
            return jnp.minimum(kt, kt_last(qt))
    else:
        def kv_block(qt, kt):
            return kt

    kernel = functools.partial(_flash_kernel, causal=causal,
                               blk_q=blk_q, blk_k=blk_k)
    cparams = pltpu.CompilerParams(
        dimension_semantics=("parallel", "parallel", "arbitrary"),
        vmem_limit_bytes=_VMEM_LIMIT_BYTES,
    )

    if hs % 128 == 0:
        # ---- Head-fused path: index head columns of the (B, T, C) slabs directly.
        # No XLA split/merge transposes; lane-dense (>=128) tiles and stores.
        grid = (B * n_head, Tq // blk_q, Tk // blk_k)   # leading axis even for megacore
        q_spec = pl.BlockSpec((1, blk_q, hs),
                              lambda bh, qt, kt: (bh // n_head, qt, bh % n_head))
        k_spec = pl.BlockSpec((1, blk_k, hs),
                              lambda bh, qt, kt: (bh // n_head, kv_block(qt, kt), bh % n_head))
        v_spec = pl.BlockSpec((1, blk_k, hs),
                              lambda bh, qt, kt: (bh // n_head, kv_block(qt, kt), bh % n_head))
        o_spec = pl.BlockSpec((1, blk_q, hs),
                              lambda bh, qt, kt: (bh // n_head, qt, bh % n_head))
        return pl.pallas_call(
            kernel,
            out_shape=jax.ShapeDtypeStruct((B, Tq, C), out_dtype),
            grid_spec=pltpu.PrefetchScalarGridSpec(
                num_scalar_prefetch=0, grid=grid,
                in_specs=[q_spec, k_spec, v_spec], out_specs=o_spec,
                scratch_shapes=[
                    pltpu.VMEM((1, blk_q, 1), jnp.float32),   # running max
                    pltpu.VMEM((1, blk_q, 1), jnp.float32),   # running denom
                    pltpu.VMEM((1, blk_q, hs), jnp.float32),  # output accumulator
                ]),
            compiler_params=cparams,
        )(qp, kp, vp)

    # ---- Fallback path (hs not a multiple of 128): split heads with XLA reshape /
    # transpose and batch all heads of one example per grid step to amortize the
    # per-step overhead and densify the VMEM working set.
    # TODO(synk): for production, pad head_size to a multiple of 128 so the fused
    # path above is used and these two transposes disappear.
    def split(x, T):
        return (x.reshape(B, T, n_head, hs).transpose(0, 2, 1, 3)
                 .reshape(B * n_head, T, hs))

    qh, kh, vh = split(qp, Tq), split(kp, Tk), split(vp, Tk)
    Hb = n_head
    grid = (B, Tq // blk_q, Tk // blk_k)
    q_spec = pl.BlockSpec((Hb, blk_q, hs), lambda g, qt, kt: (g, qt, 0))
    k_spec = pl.BlockSpec((Hb, blk_k, hs), lambda g, qt, kt: (g, kv_block(qt, kt), 0))
    v_spec = pl.BlockSpec((Hb, blk_k, hs), lambda g, qt, kt: (g, kv_block(qt, kt), 0))
    o_spec = pl.BlockSpec((Hb, blk_q, hs), lambda g, qt, kt: (g, qt, 0))
    out = pl.pallas_call(
        kernel,
        out_shape=jax.ShapeDtypeStruct((B * n_head, Tq, hs), out_dtype),
        grid_spec=pltpu.PrefetchScalarGridSpec(
            num_scalar_prefetch=0, grid=grid,
            in_specs=[q_spec, k_spec, v_spec], out_specs=o_spec,
            scratch_shapes=[
                pltpu.VMEM((Hb, blk_q, 1), jnp.float32),
                pltpu.VMEM((Hb, blk_q, 1), jnp.float32),
                pltpu.VMEM((Hb, blk_q, hs), jnp.float32),
            ]),
        compiler_params=cparams,
    )(qh, kh, vh)
    return out.reshape(B, n_head, Tq, hs).transpose(0, 2, 1, 3).reshape(B, Tq, C)


# ----------------------------------------------------------------------------- #
# Full module forward
# ----------------------------------------------------------------------------- #
def multi_head_attention_pallas(k, q, v, params, n_head, cross=False, *,
                                block_q=256, block_k=128, use_bf16=False):
    """Forward pass of the PyTorch MultiHeadAttention module.

    params: PyTorch-convention weights (out, in) and biases (out,).
    The module applies the causal mask only when cross=True (mirrors the spec).
    use_bf16=True feeds the MXU bf16 operands (accumulation & softmax stay f32).
    """
    B, Tk, C = k.shape
    Tq = q.shape[1]
    assert C % n_head == 0
    hs = C // n_head
    scale = 1.0 / (hs ** 0.5)
    in_dtype = q.dtype
    mat_dtype = jnp.bfloat16 if use_bf16 else in_dtype

    # Weights pre-transposed to (in, out) once, outside the kernels; cast to the
    # matmul dtype so DMA bytes are also halved in the bf16 case.  Biases stay f32.
    wk, bk = params["wk"].T.astype(mat_dtype), params["bk"].reshape(1, C)
    wq, bq = params["wq"].T.astype(mat_dtype), params["bq"].reshape(1, C)
    wv, bv = params["wv"].T.astype(mat_dtype), params["bv"].reshape(1, C)
    wo, bo = params["wo"].T.astype(mat_dtype), params["bo"].reshape(1, C)

    kx = k.reshape(B * Tk, C).astype(mat_dtype)
    qx = q.reshape(B * Tq, C).astype(mat_dtype)
    vx = v.reshape(B * Tk, C).astype(mat_dtype)

    kp = _dense(kx, wk, bk, out_dtype=mat_dtype).reshape(B, Tk, C)
    qp = _dense(qx, wq, bq, scale=scale, out_dtype=mat_dtype).reshape(B, Tq, C)  # fold 1/sqrt(hs)
    vp = _dense(vx, wv, bv, out_dtype=mat_dtype).reshape(B, Tk, C)

    y = _flash_attention(qp, kp, vp, n_head=n_head, causal=bool(cross),
                         block_q=block_q, block_k=block_k, out_dtype=mat_dtype)

    out = _dense(y.reshape(B * Tq, C), wo, bo, out_dtype=in_dtype)
    return out.reshape(B, Tq, C)


def multi_head_attention_ref(k, q, v, params, n_head, cross=False):
    """Pure-JAX reference mirroring the PyTorch forward exactly."""
    B, Tk, C = k.shape
    Tq = q.shape[1]
    hs = C // n_head
    kp = k @ params["wk"].T + params["bk"]
    qp = q @ params["wq"].T + params["bq"]
    vp = v @ params["wv"].T + params["bv"]
    kp = kp.reshape(B, Tk, n_head, hs).transpose(0, 2, 1, 3)
    qp = qp.reshape(B, Tq, n_head, hs).transpose(0, 2, 1, 3)
    vp = vp.reshape(B, Tk, n_head, hs).transpose(0, 2, 1, 3)
    s = jnp.einsum("bhqd,bhkd->bhqk", qp, kp) / jnp.sqrt(jnp.float32(hs))
    if cross:  # the module applies the causal mask only when cross=True
        row = jax.lax.broadcasted_iota(jnp.int32, (Tq, Tk), 0)
        col = jax.lax.broadcasted_iota(jnp.int32, (Tq, Tk), 1)
        s = jnp.where(col <= row, s, -jnp.inf)
    p = jax.nn.softmax(s, axis=-1)
    y = jnp.einsum("bhqk,bhkd->bhqd", p, vp)
    y = y.transpose(0, 2, 1, 3).reshape(B, Tq, C)
    return y @ params["wo"].T + params["bo"]


if __name__ == "__main__":
    def make_params(C, key):
        ks = jax.random.split(key, 8)
        s = 1.0 / float(C) ** 0.5
        names = ["wk", "bk", "wq", "bq", "wv", "bv", "wo", "bo"]
        shapes = [(C, C), (C,), (C, C), (C,), (C, C), (C,), (C, C), (C,)]
        return {n: jax.random.uniform(kk, sh, jnp.float32, -s, s)
                for n, kk, sh in zip(names, ks, shapes)}

    # Tolerances: tiled accumulation order differs from the monolithic reference and
    # the EUP reciprocal is approximate (refined by one Newton step).
    ATOL = RTOL = 2e-3

    key = jax.random.PRNGKey(0)
    k0, k1, k2, k3, k4, k5, k6, k7 = jax.random.split(key, 8)

    # --- config 1: small self / cross attention (hs=8 -> head-batched fallback) -----
    B, T, C, H = 2, 8, 32, 4
    params = make_params(C, k0)
    kk = jax.random.normal(k1, (B, T, C), jnp.float32)
    qq = jax.random.normal(k2, (B, T, C), jnp.float32)
    vv = jax.random.normal(k3, (B, T, C), jnp.float32)

    out = jax.block_until_ready(
        multi_head_attention_pallas(kk, qq, vv, params, H, cross=False))
    ref = multi_head_attention_ref(kk, qq, vv, params, H, cross=False)
    assert out.shape == (B, T, C)
    assert jnp.allclose(out, ref, atol=ATOL, rtol=RTOL), "self-attention mismatch"

    qc = jax.random.normal(k4, (B, 16, C), jnp.float32)   # Tq != Tk, causal
    out_c = jax.block_until_ready(
        multi_head_attention_pallas(kk, qc, vv, params, H, cross=True))
    ref_c = multi_head_attention_ref(kk, qc, vv, params, H, cross=True)
    assert out_c.shape == (B, 16, C)
    assert jnp.allclose(out_c, ref_c, atol=ATOL, rtol=RTOL), "cross/causal mismatch"

    # --- config 2: multi-tile flash path (several q/k tiles, causal DMA clamp) ------
    T2 = 32
    k2a = jax.random.normal(k5, (B, T2, C), jnp.float32)
    q2a = jax.random.normal(k6, (B, T2, C), jnp.float32)
    v2a = jax.random.normal(k7, (B, T2, C), jnp.float32)
    for cross in (False, True):
        o2 = jax.block_until_ready(
            multi_head_attention_pallas(k2a, q2a, v2a, params, H, cross=cross,
                                        block_q=8, block_k=8))
        r2 = multi_head_attention_ref(k2a, q2a, v2a, params, H, cross=cross)
        assert jnp.allclose(o2, r2, atol=ATOL, rtol=RTOL), \
            f"tiled flash mismatch (cross={cross})"

    # --- config 3: lane-dense head-fused path (hs=128), f32 and bf16-MXU variants ---
    B3, T3, C3, H3 = 2, 16, 256, 2
    keyb = jax.random.split(jax.random.PRNGKey(1), 4)
    params3 = make_params(C3, keyb[0])
    k3a = jax.random.normal(keyb[1], (B3, T3, C3), jnp.float32)
    q3a = jax.random.normal(keyb[2], (B3, T3, C3), jnp.float32)
    v3a = jax.random.normal(keyb[3], (B3, T3, C3), jnp.float32)
    for cross in (False, True):
        r3 = multi_head_attention_ref(k3a, q3a, v3a, params3, H3, cross=cross)
        o3 = jax.block_until_ready(
            multi_head_attention_pallas(k3a, q3a, v3a, params3, H3, cross=cross,
                                        block_q=8, block_k=8))
        assert jnp.allclose(o3, r3, atol=ATOL, rtol=RTOL), \
            f"head-fused flash mismatch (cross={cross})"
        o3b = jax.block_until_ready(
            multi_head_attention_pallas(k3a, q3a, v3a, params3, H3, cross=cross,
                                        use_bf16=True))
        assert jnp.allclose(o3b, r3, atol=5e-2, rtol=5e-2), \
            f"bf16 MXU path mismatch (cross={cross})"

    print("KERNEL_OK")
</pallas_src>

<mosaic_0001>
module attributes {stable_mosaic.version = 11 : i64} {
  func.func @_dense_kernel(%arg0: i32, %arg1: i32, %arg2: i32, %arg3: memref<16x32xf32, #tpu.memory_space<vmem>>, %arg4: memref<32x32xf32, #tpu.memory_space<vmem>>, %arg5: memref<1x32xf32, #tpu.memory_space<vmem>>, %arg6: memref<16x32xf32, #tpu.memory_space<vmem>>, %arg7: memref<16x32xf32, #tpu.memory_space<vmem>>) attributes {dimension_semantics = [#tpu.dimension_semantics<parallel>, #tpu.dimension_semantics<parallel>, #tpu.dimension_semantics<arbitrary>], iteration_bounds = array<i64: 1, 1, 1>, scalar_prefetch = 0 : i64, scratch_operands = 1 : i64, tpu.core_type = #tpu.core_type<tc>, window_params = [{transform_indices = @transform_0, window_bounds = array<i64: 16, 32>}, {transform_indices = @transform_1, window_bounds = array<i64: 32, 32>}, {transform_indices = @transform_2, window_bounds = array<i64: 1, 32>}, {transform_indices = @transform_3, window_bounds = array<i64: 16, 32>}]} {
    %c0_i32 = arith.constant 0 : i32
    %0 = arith.cmpi eq, %arg2, %c0_i32 : i32
    %1 = arith.extui %0 : i1 to i32
    %c0_i32_0 = arith.constant 0 : i32
    %2 = arith.cmpi ne, %1, %c0_i32_0 : i32
    scf.if %2 {
      %cst_10 = arith.constant 0.000000e+00 : f32
      %12 = vector.broadcast %cst_10 : f32 to vector<16x32xf32>
      %c0_11 = arith.constant 0 : index
      %c0_12 = arith.constant 0 : index
      %13 = vector.load %arg7[%c0_11, %c0_12] : memref<16x32xf32, #tpu.memory_space<vmem>>, vector<16x32xf32>
      tpu.vector_store %arg7[%c0_11, %c0_12], %12 {strides = array<i32>} : memref<16x32xf32, #tpu.memory_space<vmem>>, vector<16x32xf32>,
    } else {
    }
    %c0 = arith.constant 0 : index
    %c0_1 = arith.constant 0 : index
    %3 = vector.load %arg7[%c0, %c0_1] : memref<16x32xf32, #tpu.memory_space<vmem>>, vector<16x32xf32>
    %c0_2 = arith.constant 0 : index
    %c0_3 = arith.constant 0 : index
    %4 = vector.load %arg3[%c0_2, %c0_3] : memref<16x32xf32, #tpu.memory_space<vmem>>, vector<16x32xf32>
    %c0_4 = arith.constant 0 : index
    %c0_5 = arith.constant 0 : index
    %5 = vector.load %arg4[%c0_4, %c0_5] : memref<32x32xf32, #tpu.memory_space<vmem>>, vector<32x32xf32>
    %cst = arith.constant dense<0.000000e+00> : vector<16x32xf32>
    %6 = tpu.matmul %4, %5, %cst {dimension_numbers = #tpu.dot_dimension_numbers<[1], [0], [0], [1], [0, 0, 1, 1], [], []>} : vector<16x32xf32>, vector<32x32xf32>, vector<16x32xf32> -> vector<16x32xf32>
    %7 = arith.addf %3, %6 : vector<16x32xf32>
    %c0_6 = arith.constant 0 : index
    %c0_7 = arith.constant 0 : index
    %8 = vector.load %arg7[%c0_6, %c0_7] : memref<16x32xf32, #tpu.memory_space<vmem>>, vector<16x32xf32>
    tpu.vector_store %arg7[%c0_6, %c0_7], %7 {strides = array<i32>} : memref<16x32xf32, #tpu.memory_space<vmem>>, vector<16x32xf32>,
    %c0_i32_8 = arith.constant 0 : i32
    %9 = arith.cmpi eq, %arg2, %c0_i32_8 : i32
    %10 = arith.extui %9 : i1 to i32
    %c0_i32_9 = arith.constant 0 : i32
    %11 = arith.cmpi ne, %10, %c0_i32_9 : i32
    scf.if %11 {
      %c0_10 = arith.constant 0 : index
      %c0_11 = arith.constant 0 : index
      %12 = vector.load %arg7[%c0_10, %c0_11] : memref<16x32xf32, #tpu.memory_space<vmem>>, vector<16x32xf32>
      %c0_12 = arith.constant 0 : index
      %c0_13 = arith.constant 0 : index
      %13 = vector.load %arg5[%c0_12, %c0_13] : memref<1x32xf32, #tpu.memory_space<vmem>>, vector<1x32xf32>
      %14 = vector.broadcast %13 : vector<1x32xf32> to vector<16x32xf32>
      %15 = arith.addf %12, %14 : vector<16x32xf32>
      %c0_14 = arith.constant 0 : index
      %c0_15 = arith.constant 0 : index
      %16 = vector.load %arg6[%c0_14, %c0_15] : memref<16x32xf32, #tpu.memory_space<vmem>>, vector<16x32xf32>
      tpu.vector_store %arg6[%c0_14, %c0_15], %15 {strides = array<i32>} : memref<16x32xf32, #tpu.memory_space<vmem>>, vector<16x32xf32>,
    } else {
    }
    return
  }
  func.func @transform_0(%arg0: i32, %arg1: i32, %arg2: i32) -> (i32, i32) {
    %c0_i32 = arith.constant 0 : i32
    return %arg0, %arg2 : i32, i32
  }
  func.func @transform_1(%arg0: i32, %arg1: i32, %arg2: i32) -> (i32, i32) {
    %c0_i32 = arith.constant 0 : i32
    return %arg2, %arg1 : i32, i32
  }
  func.func @transform_2(%arg0: i32, %arg1: i32, %arg2: i32) -> (i32, i32) {
    %c0_i32 = arith.constant 0 : i32
    %c0_i32_0 = arith.constant 0 : i32
    return %c0_i32, %arg1 : i32, i32
  }
  func.func @transform_3(%arg0: i32, %arg1: i32, %arg2: i32) -> (i32, i32) {
    %c0_i32 = arith.constant 0 : i32
    return %arg0, %arg1 : i32, i32
  }
}

</mosaic_0001>

<llo_original>
// kernel: tpu_custom_call.1
$region0: #{tpu_custom_call.1}
  #allocation0 [shape = 'u32[]', space=smem, size = 0x4, offset = 0x4, fixed_abs, tag = 'smem constant byte address 0x4 - core index']
  #allocation1 [shape = 'u32[72,128]{1,0:T(1,128)}', space=vmem, size = 0x9000, scoped, tag = 'internal scratch']
  #allocation2 [shape = 'f32[16,32]{1,0:T(8,128)}', space=vmem, size = 0x2000, scoped, tag = 'scratch operand']
  %s0 = inlined_call_operand.hbm [shape: f32[16,32], index: 0, kind: input, shape index: {}]
  %s1 = inlined_call_operand.hbm [shape: f32[32,32], index: 1, kind: input, shape index: {}]
  %s2 = inlined_call_operand.vmem [shape: f32[1,32], index: 2, kind: input, shape index: {}]
  %s3 = inlined_call_operand.hbm [shape: f32[16,32], index: 3, kind: output, shape index: {}]
  %s4 = sld [smem:[#allocation0]]
  $region38: #{tpu_custom_call.1} parent=0
    _
  %s6 = ssub.s32 1, %s4
  %s7 = scalar_select 0, %s6, %s4
  $region1: #{tpu_custom_call.1} parent=0
    #allocation3 [shape = 'u8[8192]{0}', space=vmem, size = 0x2000, scoped, tag = 'input window, operand 0, single buffered']
    #allocation4 [shape = 's32[1]{0}', space=sflag, size = 0x4, scoped, tag = 'scoped memory for tpu_custom_call.1']
    #allocation5 [shape = 's32[1]{0}', space=sflag, size = 0x4, scoped, tag = 'scoped memory for tpu_custom_call.1']
    #allocation6 [shape = 'u8[16384]{0}', space=vmem, size = 0x4000, scoped, tag = 'input window, operand 1, single buffered']
    #allocation7 [shape = 's32[1]{0}', space=sflag, size = 0x4, scoped, tag = 'scoped memory for tpu_custom_call.1']
    #allocation8 [shape = 'u8[8192]{0}', space=vmem, size = 0x2000, scoped, tag = 'output window, operand 0, single buffered']
    %8 = vsyncpa [#allocation4], 0
    %9 = vsyncpa [#allocation7], 0
    %10 = vsyncpa [#allocation5], 0
    // Predicated region
    $region2: #{tpu_custom_call.1} parent=1 // pred_check
      _
    $region3: #{tpu_custom_call.1} parent=1 // pred_check_branch
      %12 = sbr.rel (0) target = $region5
    $region4: #{tpu_custom_call.1} parent=1 // pred_region
      %14 = vsyncadd [#allocation4], 0
      %s15 = sshll.u32 %s0, 4
      %s16 = int_to_ptr.hbm [resolvable:$true] %s15
      %s17 = sshll.u32 [#allocation3], 4
      %s18 = int_to_ptr.vmem [resolvable:$true] %s17
      %23 = dma.hbm_to_vmem [thread:$0]  %s16, 256, %s18, [#allocation4], 128, 128, 8
    $region5: #{tpu_custom_call.1} parent=1 // pred_fallthru
      _
    // Predicated region
    $region6: #{tpu_custom_call.1} parent=1 // pred_check
      _
    $region7: #{tpu_custom_call.1} parent=1 // pred_check_branch
      %25 = sbr.rel (0) target = $region9
    $region8: #{tpu_custom_call.1} parent=1 // pred_region
      %27 = vsyncadd [#allocation7], 0
      %s28 = sshll.u32 %s1, 4
      %s29 = int_to_ptr.hbm [resolvable:$true] %s28
      %s30 = sshll.u32 [#allocation6], 4
      %s31 = int_to_ptr.vmem [resolvable:$true] %s30
      %36 = dma.hbm_to_vmem [thread:$0]  %s29, 512, %s31, [#allocation7], 128, 128, 8
    $region9: #{tpu_custom_call.1} parent=1 // pred_fallthru
      _
    // Predicated region
    $region10: #{tpu_custom_call.1} parent=1 // pred_check
      _
    $region11: #{tpu_custom_call.1} parent=1 // pred_check_branch
      %38 = sbr.rel (0) target = $region13
    $region12: #{tpu_custom_call.1} parent=1 // pred_region
      _
    $region13: #{tpu_custom_call.1} parent=1 // pred_fallthru
      _
    // Predicated region
    $region14: #{tpu_custom_call.1} parent=1 // pred_check
      _
    $region15: #{tpu_custom_call.1} parent=1 // pred_check_branch
      %40 = sbr.rel (0) target = $region17
    $region16: #{tpu_custom_call.1} parent=1 // pred_region
      %42 = dma.done [#allocation4], 256
    $region17: #{tpu_custom_call.1} parent=1 // pred_fallthru
      _
    // Predicated region
    $region18: #{tpu_custom_call.1} parent=1 // pred_check
      _
    $region19: #{tpu_custom_call.1} parent=1 // pred_check_branch
      %44 = sbr.rel (0) target = $region21
    $region20: #{tpu_custom_call.1} parent=1 // pred_region
      %46 = dma.done [#allocation7], 512
    $region21: #{tpu_custom_call.1} parent=1 // pred_fallthru
      _
    %p47 = scmp.eq.s32.totalorder 0, 0
    // Predicated region
    $region22: #{tpu_custom_call.1} parent=1 // pred_check
      %p48 = pneg %p47
    $region23: #{tpu_custom_call.1} parent=1 // pred_check_branch
      %50 = sbr.rel (%p48) target = $region25
    $region24: #{tpu_custom_call.1} parent=1 // pred_region
      %vm51 = vcmask 261120
      %52 = vst.msk [vmem:[#allocation2] sm:$0xff] %vm51, 0.0
      %53 = vst.msk [vmem:[#allocation2 + $0x8] sm:$0xff] %vm51, 0.0
    $region25: #{tpu_custom_call.1} parent=1 // pred_fallthru
      _
    %v54 = vld [vmem:[#allocation2] sm:$0xff]
    %v55 = vld [vmem:[#allocation2 + $0x8] sm:$0xff]
    %v56 = vld [vmem:[#allocation3] sm:$0xff]
    %v57 = vld [vmem:[#allocation3 + $0x8] sm:$0xff]
    %v58 = vld [vmem:[#allocation6] sm:$0xff]
    %v59 = vld [vmem:[#allocation6 + $0x8] sm:$0xff]
    %v60 = vld [vmem:[#allocation6 + $0x10] sm:$0xff]
    %v61 = vld [vmem:[#allocation6 + $0x18] sm:$0xff]
    %vm62 = vcmask 261120
    %v64 = vsel %vm62, %v56, 0
    %v67 = vsel %vm62, %v57, 0
    %69 = vmatpush.msra.mxu0 0.0
    %70 = vmatpush.msra.mxu0 0.0
    %71 = vmatpush.msra.mxu0 0.0
    %72 = vmatpush.msra.mxu0 0.0
    %73 = vmatpush.msra.mxu0 0.0
    %74 = vmatpush.msra.mxu0 0.0
    %75 = vmatpush.msra.mxu0 0.0
    %76 = vmatpush.msra.mxu0 0.0
    %77 = vmatpush.msra.mxu0 0.0
    %78 = vmatpush.msra.mxu0 0.0
    %79 = vmatpush.msra.mxu0 0.0
    %80 = vmatpush.msra.mxu0 0.0
    %81 = vmatpush.msra.mxu0 %v61
    %82 = vmatpush.msra.mxu0 %v60
    %83 = vmatpush.msra.mxu0 %v59
    %84 = vmatpush.msra.mxu0 %v58
    %85 = vmatmul.f32.gmra.mxu0 %v64
    %v86 = vpop.f32.mrf.mxu0
    %v87 = vadd.f32 0.0, %v86
    %88 = vmatmul.f32.gmra.mxu0 %v67
    %v89 = vpop.f32.mrf.mxu0
    %v90 = vadd.f32 0.0, %v89
    %91 = vdwg.mxu0
    %v92 = vadd.f32 %v54, %v87
    %v93 = vadd.f32 %v55, %v90
    %94 = vst.msk [vmem:[#allocation2] sm:$0xff] %vm62, %v92
    %95 = vst.msk [vmem:[#allocation2 + $0x8] sm:$0xff] %vm62, %v93
    // Predicated region
    $region26: #{tpu_custom_call.1} parent=1 // pred_check
      %p96 = pneg %p47
    $region27: #{tpu_custom_call.1} parent=1 // pred_check_branch
      %98 = sbr.rel (%p96) target = $region29
    $region28: #{tpu_custom_call.1} parent=1 // pred_region
      %v99 = vld [vmem:[#allocation2] sm:$0xff]
      %v100 = vld [vmem:[#allocation2 + $0x8] sm:$0xff]
      %v101 = vld [vmem:[%s2] sm:$0x1]
      %v103 = vperm.slane %v101, 0
      %v105 = vadd.f32 %v99, %v103
      %v106 = vadd.f32 %v100, %v103
      %107 = vst.msk [vmem:[#allocation8] sm:$0xff] %vm62, %v105
      %108 = vst.msk [vmem:[#allocation8 + $0x8] sm:$0xff] %vm62, %v106
    $region29: #{tpu_custom_call.1} parent=1 // pred_fallthru
      _
    // Predicated region
    $region30: #{tpu_custom_call.1} parent=1 // pred_check
      _
    $region31: #{tpu_custom_call.1} parent=1 // pred_check_branch
      %110 = sbr.rel (0) target = $region33
    $region32: #{tpu_custom_call.1} parent=1 // pred_region
      %112 = vsyncadd [#allocation5], 0
      %s113 = sshll.u32 [#allocation8], 4
      %s114 = int_to_ptr.vmem [resolvable:$true] %s113
      %s115 = sshll.u32 %s3, 4
      %s116 = int_to_ptr.hbm [resolvable:$true] %s115
      %121 = dma.vmem_to_hbm [thread:$0]  %s114, 256, %s116, [#allocation5], 128, 128, 8
    $region33: #{tpu_custom_call.1} parent=1 // pred_fallthru
      _
    // Predicated region
    $region34: #{tpu_custom_call.1} parent=1 // pred_check
      _
    $region35: #{tpu_custom_call.1} parent=1 // pred_check_branch
      %123 = sbr.rel (0) target = $region37
    $region36: #{tpu_custom_call.1} parent=1 // pred_region
      %125 = dma.done [#allocation5], 256
    $region37: #{tpu_custom_call.1} parent=1 // pred_fallthru
      _
    %126 = vsyncpa [#allocation4], 1
    %127 = vsyncpa [#allocation7], 1
    %128 = vsyncpa [#allocation5], 1

</llo_original>
